<compile_context>
chip_gen: v7x
topology: tpu7x:2x2x1
jax: 0.10.0
libtpu: 0.0.40
codegen_flags: <defaults>
</compile_context>

<pallas_src>
import functools

import jax
import jax.numpy as jnp
from jax.experimental import pallas as pl
from jax.experimental.pallas import tpu as pltpu


def _round_up(x, m):
    return ((x + m - 1) // m) * m


def _emitter_kernel(z_ref, w1_ref, b1_ref, w2_ref, b2_ref, wh_ref, bh_ref,
                    out_ref, *, output_dim):
    """One batch tile per grid step; weights/biases are VMEM-resident."""
    cdt = w1_ref.dtype                      # MXU compute dtype (bf16 or f32)
    z = z_ref[...].astype(cdt)

    h1 = jnp.dot(z, w1_ref[...], preferred_element_type=jnp.float32) + b1_ref[...]
    h1 = jnp.maximum(h1, 0.0).astype(cdt)   # ReLU keeps padded lanes exactly 0

    h2 = jnp.dot(h1, w2_ref[...], preferred_element_type=jnp.float32) + b2_ref[...]
    h2 = jnp.maximum(h2, 0.0).astype(cdt)

    # Fused head: columns [0, output_dim) are loc, [output_dim, 2*output_dim)
    # are scale, the rest is 128-lane padding.  One MXU push, one store.
    head = jnp.dot(h2, wh_ref[...], preferred_element_type=jnp.float32) + bh_ref[...]

    col = jax.lax.broadcasted_iota(jnp.int32, head.shape, 1)
    out = jnp.where(col < output_dim, head, jnp.exp(head))   # exp only on scale
    out_ref[...] = out.astype(out_ref.dtype)


def prepare_emitter_params(params, compute_dtype=jnp.bfloat16):
    """One-time layout conversion from the PyTorch Linear convention.

    * weights become (in_features, out_features) and are cast to compute_dtype
      (bf16 by default: native MXU dtype, half the HBM/VMEM footprint).
    * emission_dim is zero-padded to a 128-lane multiple; ReLU keeps the padded
      lanes exactly 0, so results are unchanged.
    * loc / scale heads are fused into one (e_pad, head_w) matrix with loc at
      columns [0, output_dim) and scale at [output_dim, 2*output_dim), padded
      to a 128-lane multiple -> one matmul + one lane-dense store per tile.
    * biases stay float32 (they add into the f32 accumulator).
    """
    output_dim, emission_dim = params["wloc"].shape
    z_dim = params["w1"].shape[1]
    e_pad = _round_up(emission_dim, 128)
    head_w = _round_up(2 * output_dim, 128)
    cdt = jnp.dtype(compute_dtype)

    w1 = jnp.zeros((z_dim, e_pad), cdt).at[:, :emission_dim].set(
        params["w1"].T.astype(cdt))
    w2 = jnp.zeros((e_pad, e_pad), cdt).at[:emission_dim, :emission_dim].set(
        params["w2"].T.astype(cdt))

    w_head = jnp.zeros((e_pad, head_w), cdt)
    w_head = w_head.at[:emission_dim, :output_dim].set(params["wloc"].T.astype(cdt))
    w_head = w_head.at[:emission_dim, output_dim:2 * output_dim].set(
        params["wscale"].T.astype(cdt))

    b1 = jnp.zeros((1, e_pad), jnp.float32).at[0, :emission_dim].set(
        params["b1"].astype(jnp.float32))
    b2 = jnp.zeros((1, e_pad), jnp.float32).at[0, :emission_dim].set(
        params["b2"].astype(jnp.float32))
    b_head = jnp.zeros((1, head_w), jnp.float32)
    b_head = b_head.at[0, :output_dim].set(params["bloc"].astype(jnp.float32))
    b_head = b_head.at[0, output_dim:2 * output_dim].set(
        params["bscale"].astype(jnp.float32))

    return {"w1": w1, "b1": b1, "w2": w2, "b2": b2,
            "w_head": w_head, "b_head": b_head}


def _choose_tile(n_rows, tile_b, sublane):
    """Rows per grid step: a multiple of `sublane`, or the full batch.

    Never materializes a padded copy of the input (the ragged final block is
    masked by Pallas).  When a single tile would cover the whole batch, split
    it in two so the "parallel" axis can shard across v7x's two TensorCores.
    """
    tile = _round_up(max(sublane, min(tile_b, n_rows)), sublane)
    if tile >= n_rows:
        half = _round_up(pl.cdiv(n_rows, 2), sublane)
        if n_rows >= 2 * sublane and half < n_rows:
            return half
        return n_rows          # full-dim block: always a legal block shape
    return tile


def emitter_forward(z_t, prep, output_dim, tile_b=512, out_dtype=None):
    """Fused Emitter forward on pre-prepared params.

    z_t: (B, z_dim).  Returns (x_loc, x_scale), each (B, output_dim).
    output_dim / tile_b / out_dtype must be static (jit static_argnames).
    out_dtype=jnp.bfloat16 halves writeback bytes (recommended on v5e) if the
    consumer tolerates bf16; default keeps z_t.dtype.
    """
    B, z_dim = z_t.shape
    e_pad = prep["w1"].shape[1]
    head_w = prep["w_head"].shape[1]
    out_dtype = jnp.dtype(z_t.dtype if out_dtype is None else out_dtype)

    # bf16 outputs need 16-row sublane tiles; f32 needs 8.
    sublane = 8 if out_dtype.itemsize >= 4 else 16
    tile = _choose_tile(B, tile_b, sublane)
    grid = (pl.cdiv(B, tile),)

    # Weights/biases: constant index_map (VMEM-resident across the batch grid)
    # and single-buffered -- fetched once, half the VMEM of default 2x buffers.
    def resident(a):
        return pl.BlockSpec(a.shape, lambda i: (0, 0),
                            pipeline_mode=pl.Buffered(1))

    cost = pl.CostEstimate(
        flops=2 * B * (z_dim * e_pad + e_pad * e_pad + e_pad * head_w),
        transcendentals=B * head_w,
        bytes_accessed=(z_t.size * z_t.dtype.itemsize
                        + sum(int(a.size) * a.dtype.itemsize for a in prep.values())
                        + B * head_w * out_dtype.itemsize),
    )

    # TODO(synk): for emission_dim large enough that w2 + activation tiles
    # exceed v7x's scoped VMEM, add a K-reduction grid axis over w2 (marked
    # "arbitrary", f32 VMEM accumulator with pl.when init/finalize) and set
    # vmem_limit_bytes explicitly in CompilerParams.
    out = pl.pallas_call(
        functools.partial(_emitter_kernel, output_dim=output_dim),
        out_shape=jax.ShapeDtypeStruct((B, head_w), out_dtype),
        grid=grid,
        in_specs=[
            pl.BlockSpec((tile, z_dim), lambda i: (i, 0)),
            resident(prep["w1"]), resident(prep["b1"]),
            resident(prep["w2"]), resident(prep["b2"]),
            resident(prep["w_head"]), resident(prep["b_head"]),
        ],
        out_specs=pl.BlockSpec((tile, head_w), lambda i: (i, 0)),
        compiler_params=pltpu.CompilerParams(
            dimension_semantics=("parallel",)),
        cost_estimate=cost,
    )(z_t, prep["w1"], prep["b1"], prep["w2"], prep["b2"],
      prep["w_head"], prep["b_head"])

    return out[:, :output_dim], out[:, output_dim:2 * output_dim]


def emitter_forward_seq(z_seq, prep, output_dim, tile_b=512, out_dtype=None):
    """Apply the Emitter to a whole (T, B, z_dim) rollout in ONE pallas_call."""
    T, B, z_dim = z_seq.shape
    loc, scale = emitter_forward(z_seq.reshape(T * B, z_dim), prep,
                                 output_dim, tile_b, out_dtype)
    return loc.reshape(T, B, output_dim), scale.reshape(T, B, output_dim)


def init_emitter_params(key, output_dim, z_dim, emission_dim):
    """Deterministic synthetic parameters (PyTorch Linear weight convention)."""
    ks = jax.random.split(key, 8)
    s = 0.1
    return {
        "w1": s * jax.random.normal(ks[0], (emission_dim, z_dim), jnp.float32),
        "b1": s * jax.random.normal(ks[1], (emission_dim,), jnp.float32),
        "w2": s * jax.random.normal(ks[2], (emission_dim, emission_dim), jnp.float32),
        "b2": s * jax.random.normal(ks[3], (emission_dim,), jnp.float32),
        "wloc": s * jax.random.normal(ks[4], (output_dim, emission_dim), jnp.float32),
        "bloc": s * jax.random.normal(ks[5], (output_dim,), jnp.float32),
        "wscale": s * jax.random.normal(ks[6], (output_dim, emission_dim), jnp.float32),
        "bscale": s * jax.random.normal(ks[7], (output_dim,), jnp.float32),
    }


def _reference_forward(z_t, p):
    h1 = jax.nn.relu(z_t @ p["w1"].T + p["b1"])
    h2 = jax.nn.relu(h1 @ p["w2"].T + p["b2"])
    x_loc = h2 @ p["wloc"].T + p["bloc"]
    x_scale = jnp.exp(h2 @ p["wscale"].T + p["bscale"])
    return x_loc, x_scale


if __name__ == "__main__":
    # Small polyphonic-music-style dims.
    batch, z_dim, emission_dim, output_dim = 8, 16, 32, 24
    seq_len, seq_batch = 6, 9        # T*B = 54: exercises the ragged final tile

    key = jax.random.PRNGKey(0)
    k_params, k_z, k_zseq = jax.random.split(key, 3)
    params = init_emitter_params(k_params, output_dim, z_dim, emission_dim)

    prep_bf16 = prepare_emitter_params(params)                        # bf16 weights (default)
    prep_f32 = prepare_emitter_params(params, compute_dtype=jnp.float32)

    fwd = jax.jit(emitter_forward,
                  static_argnames=("output_dim", "tile_b", "out_dtype"))
    fwd_seq = jax.jit(emitter_forward_seq,
                      static_argnames=("output_dim", "tile_b", "out_dtype"))

    z_t = jax.random.normal(k_z, (batch, z_dim), jnp.float32)
    ref_loc, ref_scale = _reference_forward(z_t, params)

    # --- f32 weights: padding / fused-head / masking machinery is exact ---
    loc, scale = fwd(z_t, prep_f32, output_dim=output_dim)
    jax.block_until_ready((loc, scale))
    assert loc.shape == (batch, output_dim) and scale.shape == (batch, output_dim)
    assert jnp.allclose(loc, ref_loc, atol=2e-5, rtol=2e-5)
    assert jnp.allclose(scale, ref_scale, atol=2e-5, rtol=2e-5)

    # --- bf16 weights (default prep): f32 accumulation, ~1e-3 level error ---
    loc, scale = fwd(z_t, prep_bf16, output_dim=output_dim)
    jax.block_until_ready((loc, scale))
    assert jnp.allclose(loc, ref_loc, atol=5e-2, rtol=5e-2)
    assert jnp.allclose(scale, ref_scale, atol=5e-2, rtol=5e-2)

    # --- whole rollout in one call; small tile exercises the batch grid and
    #     the ragged (masked) final block; bf16 outputs exercise out_dtype ---
    z_seq = jax.random.normal(k_zseq, (seq_len, seq_batch, z_dim), jnp.float32)
    loc_s, scale_s = fwd_seq(z_seq, prep_bf16, output_dim=output_dim, tile_b=16,
                             out_dtype=jnp.bfloat16)
    jax.block_until_ready((loc_s, scale_s))

    ref_loc_s, ref_scale_s = _reference_forward(
        z_seq.reshape(seq_len * seq_batch, z_dim), params)
    assert loc_s.shape == (seq_len, seq_batch, output_dim)
    assert jnp.allclose(loc_s.reshape(-1, output_dim).astype(jnp.float32),
                        ref_loc_s, atol=1e-1, rtol=1e-1)
    assert jnp.allclose(scale_s.reshape(-1, output_dim).astype(jnp.float32),
                        ref_scale_s, atol=1e-1, rtol=1e-1)

    print("KERNEL_OK")
</pallas_src>

<mosaic_0001>
module attributes {stable_mosaic.version = 11 : i64} {
  func.func @_emitter_kernel(%arg0: i32, %arg1: memref<8x16xf32, #tpu.memory_space<vmem>>, %arg2: memref<16x128xf32, #tpu.memory_space<vmem>>, %arg3: memref<1x128xf32, #tpu.memory_space<vmem>>, %arg4: memref<128x128xf32, #tpu.memory_space<vmem>>, %arg5: memref<1x128xf32, #tpu.memory_space<vmem>>, %arg6: memref<128x128xf32, #tpu.memory_space<vmem>>, %arg7: memref<1x128xf32, #tpu.memory_space<vmem>>, %arg8: memref<8x128xf32, #tpu.memory_space<vmem>>) attributes {dimension_semantics = [#tpu.dimension_semantics<parallel>], iteration_bounds = array<i64: 1>, scalar_prefetch = 0 : i64, scratch_operands = 0 : i64, tpu.core_type = #tpu.core_type<tc>, window_params = [{transform_indices = @transform_0, window_bounds = array<i64: 8, 16>}, {pipeline_mode = #tpu.pipeline_mode<synchronous>, transform_indices = @transform_1, window_bounds = array<i64: 16, 128>}, {pipeline_mode = #tpu.pipeline_mode<synchronous>, transform_indices = @transform_2, window_bounds = array<i64: 1, 128>}, {pipeline_mode = #tpu.pipeline_mode<synchronous>, transform_indices = @transform_3, window_bounds = array<i64: 128, 128>}, {pipeline_mode = #tpu.pipeline_mode<synchronous>, transform_indices = @transform_4, window_bounds = array<i64: 1, 128>}, {pipeline_mode = #tpu.pipeline_mode<synchronous>, transform_indices = @transform_5, window_bounds = array<i64: 128, 128>}, {pipeline_mode = #tpu.pipeline_mode<synchronous>, transform_indices = @transform_6, window_bounds = array<i64: 1, 128>}, {transform_indices = @transform_7, window_bounds = array<i64: 8, 128>}]} {
    %c0 = arith.constant 0 : index
    %c0_0 = arith.constant 0 : index
    %0 = vector.load %arg1[%c0, %c0_0] : memref<8x16xf32, #tpu.memory_space<vmem>>, vector<8x16xf32>
    %c0_1 = arith.constant 0 : index
    %c0_2 = arith.constant 0 : index
    %1 = vector.load %arg2[%c0_1, %c0_2] : memref<16x128xf32, #tpu.memory_space<vmem>>, vector<16x128xf32>
    %cst = arith.constant dense<0.000000e+00> : vector<8x128xf32>
    %2 = tpu.matmul %0, %1, %cst {dimension_numbers = #tpu.dot_dimension_numbers<[1], [0], [0], [1], [0, 0, 1, 1], [], []>} : vector<8x16xf32>, vector<16x128xf32>, vector<8x128xf32> -> vector<8x128xf32>
    %c0_3 = arith.constant 0 : index
    %c0_4 = arith.constant 0 : index
    %3 = vector.load %arg3[%c0_3, %c0_4] : memref<1x128xf32, #tpu.memory_space<vmem>>, vector<1x128xf32>
    %4 = vector.broadcast %3 : vector<1x128xf32> to vector<8x128xf32>
    %5 = arith.addf %2, %4 : vector<8x128xf32>
    %cst_5 = arith.constant 0.000000e+00 : f32
    %6 = vector.broadcast %cst_5 : f32 to vector<8x128xf32>
    %7 = arith.maximumf %5, %6 : vector<8x128xf32>
    %c0_6 = arith.constant 0 : index
    %c0_7 = arith.constant 0 : index
    %8 = vector.load %arg4[%c0_6, %c0_7] : memref<128x128xf32, #tpu.memory_space<vmem>>, vector<128x128xf32>
    %cst_8 = arith.constant dense<0.000000e+00> : vector<8x128xf32>
    %9 = tpu.matmul %7, %8, %cst_8 {dimension_numbers = #tpu.dot_dimension_numbers<[1], [0], [0], [1], [0, 0, 1, 1], [], []>} : vector<8x128xf32>, vector<128x128xf32>, vector<8x128xf32> -> vector<8x128xf32>
    %c0_9 = arith.constant 0 : index
    %c0_10 = arith.constant 0 : index
    %10 = vector.load %arg5[%c0_9, %c0_10] : memref<1x128xf32, #tpu.memory_space<vmem>>, vector<1x128xf32>
    %11 = vector.broadcast %10 : vector<1x128xf32> to vector<8x128xf32>
    %12 = arith.addf %9, %11 : vector<8x128xf32>
    %cst_11 = arith.constant 0.000000e+00 : f32
    %13 = vector.broadcast %cst_11 : f32 to vector<8x128xf32>
    %14 = arith.maximumf %12, %13 : vector<8x128xf32>
    %c0_12 = arith.constant 0 : index
    %c0_13 = arith.constant 0 : index
    %15 = vector.load %arg6[%c0_12, %c0_13] : memref<128x128xf32, #tpu.memory_space<vmem>>, vector<128x128xf32>
    %cst_14 = arith.constant dense<0.000000e+00> : vector<8x128xf32>
    %16 = tpu.matmul %14, %15, %cst_14 {dimension_numbers = #tpu.dot_dimension_numbers<[1], [0], [0], [1], [0, 0, 1, 1], [], []>} : vector<8x128xf32>, vector<128x128xf32>, vector<8x128xf32> -> vector<8x128xf32>
    %c0_15 = arith.constant 0 : index
    %c0_16 = arith.constant 0 : index
    %17 = vector.load %arg7[%c0_15, %c0_16] : memref<1x128xf32, #tpu.memory_space<vmem>>, vector<1x128xf32>
    %18 = vector.broadcast %17 : vector<1x128xf32> to vector<8x128xf32>
    %19 = arith.addf %16, %18 : vector<8x128xf32>
    %20 = tpu.iota {dimensions = array<i32: 1>} : vector<8x128xi32>
    %c24_i32 = arith.constant 24 : i32
    %21 = vector.broadcast %c24_i32 : i32 to vector<8x128xi32>
    %22 = arith.cmpi slt, %20, %21 : vector<8x128xi32>
    %23 = math.exp %19 : vector<8x128xf32>
    %24 = arith.select %22, %19, %23 : vector<8x128xi1>, vector<8x128xf32>
    %c0_17 = arith.constant 0 : index
    %c0_18 = arith.constant 0 : index
    %25 = vector.load %arg8[%c0_17, %c0_18] : memref<8x128xf32, #tpu.memory_space<vmem>>, vector<8x128xf32>
    tpu.vector_store %arg8[%c0_17, %c0_18], %24 {strides = array<i32>} : memref<8x128xf32, #tpu.memory_space<vmem>>, vector<8x128xf32>,
    return
  }
  func.func @transform_0(%arg0: i32) -> (i32, i32) {
    %c0_i32 = arith.constant 0 : i32
    %c0_i32_0 = arith.constant 0 : i32
    return %arg0, %c0_i32 : i32, i32
  }
  func.func @transform_1(%arg0: i32) -> (i32, i32) {
    %c0_i32 = arith.constant 0 : i32
    %c0_i32_0 = arith.constant 0 : i32
    %c0_i32_1 = arith.constant 0 : i32
    return %c0_i32, %c0_i32_0 : i32, i32
  }
  func.func @transform_2(%arg0: i32) -> (i32, i32) {
    %c0_i32 = arith.constant 0 : i32
    %c0_i32_0 = arith.constant 0 : i32
    %c0_i32_1 = arith.constant 0 : i32
    return %c0_i32, %c0_i32_0 : i32, i32
  }
  func.func @transform_3(%arg0: i32) -> (i32, i32) {
    %c0_i32 = arith.constant 0 : i32
    %c0_i32_0 = arith.constant 0 : i32
    %c0_i32_1 = arith.constant 0 : i32
    return %c0_i32, %c0_i32_0 : i32, i32
  }
  func.func @transform_4(%arg0: i32) -> (i32, i32) {
    %c0_i32 = arith.constant 0 : i32
    %c0_i32_0 = arith.constant 0 : i32
    %c0_i32_1 = arith.constant 0 : i32
    return %c0_i32, %c0_i32_0 : i32, i32
  }
  func.func @transform_5(%arg0: i32) -> (i32, i32) {
    %c0_i32 = arith.constant 0 : i32
    %c0_i32_0 = arith.constant 0 : i32
    %c0_i32_1 = arith.constant 0 : i32
    return %c0_i32, %c0_i32_0 : i32, i32
  }
  func.func @transform_6(%arg0: i32) -> (i32, i32) {
    %c0_i32 = arith.constant 0 : i32
    %c0_i32_0 = arith.constant 0 : i32
    %c0_i32_1 = arith.constant 0 : i32
    return %c0_i32, %c0_i32_0 : i32, i32
  }
  func.func @transform_7(%arg0: i32) -> (i32, i32) {
    %c0_i32 = arith.constant 0 : i32
    %c0_i32_0 = arith.constant 0 : i32
    return %arg0, %c0_i32 : i32, i32
  }
}

</mosaic_0001>

<llo_original>
// kernel: emitter_forward.1
$region0: #{emitter_forward.1}
  #allocation0 [shape = 'u32[]', space=smem, size = 0x4, offset = 0x4, fixed_abs, tag = 'smem constant byte address 0x4 - core index']
  #allocation1 [shape = 'u32[144,128]{1,0:T(1,128)}', space=vmem, size = 0x12000, scoped, tag = 'internal scratch']
  %s0 = inlined_call_operand.hbm [shape: f32[8,16], index: 0, kind: input, shape index: {}]
  %s1 = inlined_call_operand.hbm [shape: f32[16,128], index: 1, kind: input, shape index: {}]
  %s2 = inlined_call_operand.vmem [shape: f32[1,128], index: 2, kind: input, shape index: {}]
  %s3 = inlined_call_operand.hbm [shape: f32[128,128], index: 3, kind: input, shape index: {}]
  %s4 = inlined_call_operand.vmem [shape: f32[1,128], index: 4, kind: input, shape index: {}]
  %s5 = inlined_call_operand.hbm [shape: f32[128,128], index: 5, kind: input, shape index: {}]
  %s6 = inlined_call_operand.vmem [shape: f32[1,128], index: 6, kind: input, shape index: {}]
  %s7 = inlined_call_operand.vmem [shape: f32[8,128], index: 7, kind: output, shape index: {}]
  %s8 = sld [smem:[#allocation0]]
  $region54: #{emitter_forward.1} parent=0
    _
  %s10 = ssub.s32 1, %s8
  %s11 = scalar_select 0, %s10, %s8
  $region1: #{emitter_forward.1} parent=0
    #allocation2 [shape = 'u8[4096]{0}', space=vmem, size = 0x1000, scoped, tag = 'input window, operand 0, single buffered']
    #allocation3 [shape = 's32[1]{0}', space=sflag, size = 0x4, scoped, tag = 'scoped memory for emitter_forward.1']
    #allocation4 [shape = 'u8[8192]{0}', space=vmem, size = 0x2000, scoped, tag = 'input window, operand 1, single buffered']
    #allocation5 [shape = 's32[1]{0}', space=sflag, size = 0x4, scoped, tag = 'scoped memory for emitter_forward.1']
    #allocation6 [shape = 'u8[65536]{0}', space=vmem, size = 0x10000, scoped, tag = 'input window, operand 3, single buffered']
    #allocation7 [shape = 'u8[65536]{0}', space=vmem, size = 0x10000, scoped, tag = 'input window, operand 5, single buffered']
    #allocation8 [shape = 's32[1]{0}', space=sflag, size = 0x4, scoped, tag = 'scoped memory for emitter_forward.1']
    %12 = vsyncpa [#allocation3], 0
    %13 = vsyncpa [#allocation5], 0
    %14 = vsyncpa [#allocation8], 0
    // Predicated region
    $region2: #{emitter_forward.1} parent=1 // pred_check
      _
    $region3: #{emitter_forward.1} parent=1 // pred_check_branch
      %16 = sbr.rel (0) target = $region5
    $region4: #{emitter_forward.1} parent=1 // pred_region
      %s18 = ssub.s32 128, 128
      %19 = vsyncadd [#allocation3], %s18
      %s21 = sshll.u32 [#allocation2], 4
      %s22 = int_to_ptr.vmem [resolvable:$true] %s21
      %24 = dma.hbm_to_vmem [thread:$0]  %s0, 128, %s22, [#allocation3]
    $region5: #{emitter_forward.1} parent=1 // pred_fallthru
      _
    // Predicated region
    $region6: #{emitter_forward.1} parent=1 // pred_check
      _
    $region7: #{emitter_forward.1} parent=1 // pred_check_branch
      %26 = sbr.rel (0) target = $region9
    $region8: #{emitter_forward.1} parent=1 // pred_region
      %s28 = ssub.s32 256, 256
      %29 = vsyncadd [#allocation5], %s28
      %s30 = sshll.u32 [#allocation4], 4
      %s31 = int_to_ptr.vmem [resolvable:$true] %s30
      %36 = dma.hbm_to_vmem [thread:$0]  %s1, 256, %s31, [#allocation5], 128, 128, 8
    $region9: #{emitter_forward.1} parent=1 // pred_fallthru
      _
    // Predicated region
    $region10: #{emitter_forward.1} parent=1 // pred_check
      _
    $region11: #{emitter_forward.1} parent=1 // pred_check_branch
      %38 = sbr.rel (0) target = $region13
    $region12: #{emitter_forward.1} parent=1 // pred_region
      _
    $region13: #{emitter_forward.1} parent=1 // pred_fallthru
      _
    // Predicated region
    $region14: #{emitter_forward.1} parent=1 // pred_check
      _
    $region15: #{emitter_forward.1} parent=1 // pred_check_branch
      %40 = sbr.rel (0) target = $region17
    $region16: #{emitter_forward.1} parent=1 // pred_region
      %s42 = ssub.s32 2048, 2048
      %43 = vsyncadd [#allocation5], %s42
      %s44 = sshll.u32 [#allocation6], 4
      %s45 = int_to_ptr.vmem [resolvable:$true] %s44
      %50 = dma.hbm_to_vmem [thread:$0]  %s3, 2048, %s45, [#allocation5], 128, 128, 8
    $region17: #{emitter_forward.1} parent=1 // pred_fallthru
      _
    // Predicated region
    $region18: #{emitter_forward.1} parent=1 // pred_check
      _
    $region19: #{emitter_forward.1} parent=1 // pred_check_branch
      %52 = sbr.rel (0) target = $region21
    $region20: #{emitter_forward.1} parent=1 // pred_region
      _
    $region21: #{emitter_forward.1} parent=1 // pred_fallthru
      _
    // Predicated region
    $region22: #{emitter_forward.1} parent=1 // pred_check
      _
    $region23: #{emitter_forward.1} parent=1 // pred_check_branch
      %54 = sbr.rel (0) target = $region25
    $region24: #{emitter_forward.1} parent=1 // pred_region
      %s56 = ssub.s32 2048, 2048
      %57 = vsyncadd [#allocation8], %s56
      %s58 = sshll.u32 [#allocation7], 4
      %s59 = int_to_ptr.vmem [resolvable:$true] %s58
      %64 = dma.hbm_to_vmem [thread:$0]  %s5, 2048, %s59, [#allocation8], 128, 128, 8
    $region25: #{emitter_forward.1} parent=1 // pred_fallthru
      _
    // Predicated region
    $region26: #{emitter_forward.1} parent=1 // pred_check
      _
    $region27: #{emitter_forward.1} parent=1 // pred_check_branch
      %66 = sbr.rel (0) target = $region29
    $region28: #{emitter_forward.1} parent=1 // pred_region
      _
    $region29: #{emitter_forward.1} parent=1 // pred_fallthru
      _
    // Predicated region
    $region30: #{emitter_forward.1} parent=1 // pred_check
      _
    $region31: #{emitter_forward.1} parent=1 // pred_check_branch
      %68 = sbr.rel (0) target = $region33
    $region32: #{emitter_forward.1} parent=1 // pred_region
      %69 = dma.done [#allocation3], 128
    $region33: #{emitter_forward.1} parent=1 // pred_fallthru
      _
    // Predicated region
    $region34: #{emitter_forward.1} parent=1 // pred_check
      _
    $region35: #{emitter_forward.1} parent=1 // pred_check_branch
      %71 = sbr.rel (0) target = $region37
    $region36: #{emitter_forward.1} parent=1 // pred_region
      %72 = dma.done [#allocation5], 256
    $region37: #{emitter_forward.1} parent=1 // pred_fallthru
      _
    // Predicated region
    $region38: #{emitter_forward.1} parent=1 // pred_check
      _
    $region39: #{emitter_forward.1} parent=1 // pred_check_branch
      %74 = sbr.rel (0) target = $region41
    $region40: #{emitter_forward.1} parent=1 // pred_region
      %75 = dma.done [#allocation5], 2048
    $region41: #{emitter_forward.1} parent=1 // pred_fallthru
      _
    // Predicated region
    $region42: #{emitter_forward.1} parent=1 // pred_check
      _
    $region43: #{emitter_forward.1} parent=1 // pred_check_branch
      %77 = sbr.rel (0) target = $region45
    $region44: #{emitter_forward.1} parent=1 // pred_region
      %78 = dma.done [#allocation8], 2048
    $region45: #{emitter_forward.1} parent=1 // pred_fallthru
      _
    %v79 = vld [vmem:[#allocation2] sm:$0xff]
    %v80 = vld [vmem:[#allocation4] sm:$0xff]
    %v81 = vld [vmem:[#allocation4 + $0x8] sm:$0xff]
    %v82 = vld [vmem:[%s2] sm:$0x1]
    %v84 = vlaneseq
    %v85 = vshrl.u32 %v84, 7
    %v86 = vsub.s32 0, %v85
    %v87 = vrot.slane %v82, %v86
    %vm89 = vcmask 130048
    %v91 = vsel %vm89, %v79, 0
    %93 = vmatprep.subr.mxu0 0.0
    %94 = vmatpush1.msra.mxu0 %v80
    %95 = vmatprep.subr.mxu0 0.0
    %96 = vmatpush1.msra.mxu0 %v81
    %97 = vmatprep.subr.mxu0 0.0
    %98 = vmatpush1.msra.mxu0 0.0
    %99 = vmatprep.subr.mxu0 0.0
    %100 = vmatpush1.msra.mxu0 0.0
    %101 = vmatprep.subr.mxu0 0.0
    %102 = vmatpush1.msra.mxu0 0.0
    %103 = vmatprep.subr.mxu0 0.0
    %104 = vmatpush1.msra.mxu0 0.0
    %105 = vmatprep.subr.mxu0 0.0
    %106 = vmatpush1.msra.mxu0 0.0
    %107 = vmatprep.subr.mxu0 0.0
    %108 = vmatpush1.msra.mxu0 0.0
    %109 = vmatprep.subr.mxu0 0.0
    %110 = vmatpush1.msra.mxu0 0.0
    %111 = vmatprep.subr.mxu0 0.0
    %112 = vmatpush1.msra.mxu0 0.0
    %113 = vmatprep.subr.mxu0 0.0
    %114 = vmatpush1.msra.mxu0 0.0
    %115 = vmatprep.subr.mxu0 0.0
    %116 = vmatpush1.msra.mxu0 0.0
    %117 = vmatprep.subr.mxu0 0.0
    %118 = vmatpush1.msra.mxu0 0.0
    %119 = vmatprep.subr.mxu0 0.0
    %120 = vmatpush1.msra.mxu0 0.0
    %121 = vmatprep.subr.mxu0 0.0
    %122 = vmatpush1.msra.mxu0 0.0
    %123 = vmatprep.subr.mxu0 0.0
    %124 = vmatpush1.msra.mxu0 0.0
    %125 = vmatprep.subr.mxu0 0.0
    %126 = vmatpush1.msra.mxu0 0.0
    %127 = vmatprep.subr.mxu0 0.0
    %128 = vmatpush1.msra.mxu0 0.0
    %129 = vmatprep.subr.mxu0 0.0
    %130 = vmatpush1.msra.mxu0 0.0
    %131 = vmatprep.subr.mxu0 0.0
    %132 = vmatpush1.msra.mxu0 0.0
    %133 = vmatprep.subr.mxu0 0.0
    %134 = vmatpush1.msra.mxu0 0.0
    %135 = vmatprep.subr.mxu0 0.0
    %136 = vmatpush1.msra.mxu0 0.0
    %137 = vmatprep.subr.mxu0 0.0
    %138 = vmatpush1.msra.mxu0 0.0
    %139 = vmatprep.subr.mxu0 0.0
    %140 = vmatpush1.msra.mxu0 0.0
    %141 = vmatprep.subr.mxu0 0.0
    %142 = vmatpush1.msra.mxu0 0.0
    %143 = vmatprep.subr.mxu0 0.0
    %144 = vmatpush1.msra.mxu0 0.0
    %145 = vmatprep.subr.mxu0 0.0
    %146 = vmatpush1.msra.mxu0 0.0
    %147 = vmatprep.subr.mxu0 0.0
    %148 = vmatpush1.msra.mxu0 0.0
    %149 = vmatprep.subr.mxu0 0.0
    %150 = vmatpush1.msra.mxu0 0.0
    %151 = vmatprep.subr.mxu0 0.0
    %152 = vmatpush1.msra.mxu0 0.0
    %153 = vmatprep.subr.mxu0 0.0
    %154 = vmatpush1.msra.mxu0 0.0
    %155 = vmatprep.subr.mxu0 0.0
    %156 = vmatpush1.msra.mxu0 0.0
    %157 = vmatprep.mubr.f32.mxu0 0.0
    %158 = vmatmul.mubr.f32.gmra.mrb[0].mxu0 %v91
    %v159 = vpop.f32.mrb[0].mxu0
    %v160 = vadd.f32 %v87, %v159
    %v161 = vpop.f32.mrb[0].mxu0
    %162 = vdwg.mxu0
    %v163 = vmax.f32 %v160, 0.0
    %v164 = vld [vmem:[#allocation6] sm:$0xff]
    %v165 = vld [vmem:[#allocation6 + $0x8] sm:$0xff]
    %v166 = vld [vmem:[#allocation6 + $0x10] sm:$0xff]
    %v167 = vld [vmem:[#allocation6 + $0x18] sm:$0xff]
    %v168 = vld [vmem:[#allocation6 + $0x20] sm:$0xff]
    %v169 = vld [vmem:[#allocation6 + $0x28] sm:$0xff]
    %v170 = vld [vmem:[#allocation6 + $0x30] sm:$0xff]
    %v171 = vld [vmem:[#allocation6 + $0x38] sm:$0xff]
    %v172 = vld [vmem:[#allocation6 + $0x40] sm:$0xff]
    %v173 = vld [vmem:[#allocation6 + $0x48] sm:$0xff]
    %v174 = vld [vmem:[#allocation6 + $0x50] sm:$0xff]
    %v175 = vld [vmem:[#allocation6 + $0x58] sm:$0xff]
    %v176 = vld [vmem:[#allocation6 + $0x60] sm:$0xff]
    %v177 = vld [vmem:[#allocation6 + $0x68] sm:$0xff]
    %v178 = vld [vmem:[#allocation6 + $0x70] sm:$0xff]
    %v179 = vld [vmem:[#allocation6 + $0x78] sm:$0xff]
    %v180 = vld [vmem:[%s4] sm:$0x1]
    %v182 = vlaneseq
    %v183 = vshrl.u32 %v182, 7
    %v184 = vsub.s32 0, %v183
    %v185 = vrot.slane %v180, %v184
    %187 = vmatprep.subr.mxu0 0.0
    %188 = vmatpush1.msra.mxu0 %v164
    %189 = vmatprep.subr.mxu0 0.0
    %190 = vmatpush1.msra.mxu0 %v165
    %191 = vmatprep.subr.mxu0 0.0
    %192 = vmatpush1.msra.mxu0 %v166
    %193 = vmatprep.subr.mxu0 0.0
    %194 = vmatpush1.msra.mxu0 %v167
    %195 = vmatprep.subr.mxu0 0.0
    %196 = vmatpush1.msra.mxu0 %v168
    %197 = vmatprep.subr.mxu0 0.0
    %198 = vmatpush1.msra.mxu0 %v169
    %199 = vmatprep.subr.mxu0 0.0
    %200 = vmatpush1.msra.mxu0 %v170
    %201 = vmatprep.subr.mxu0 0.0
    %202 = vmatpush1.msra.mxu0 %v171
    %203 = vmatprep.subr.mxu0 0.0
    %204 = vmatpush1.msra.mxu0 %v172
    %205 = vmatprep.subr.mxu0 0.0
    %206 = vmatpush1.msra.mxu0 %v173
    %207 = vmatprep.subr.mxu0 0.0
    %208 = vmatpush1.msra.mxu0 %v174
    %209 = vmatprep.subr.mxu0 0.0
    %210 = vmatpush1.msra.mxu0 %v175
    %211 = vmatprep.subr.mxu0 0.0
    %212 = vmatpush1.msra.mxu0 %v176
    %213 = vmatprep.subr.mxu0 0.0
    %214 = vmatpush1.msra.mxu0 %v177
    %215 = vmatprep.subr.mxu0 0.0
    %216 = vmatpush1.msra.mxu0 %v178
    %217 = vmatprep.subr.mxu0 0.0
    %218 = vmatpush1.msra.mxu0 %v179
    %219 = vmatprep.subr.mxu0 0.0
    %220 = vmatpush1.msra.mxu0 0.0
    %221 = vmatprep.subr.mxu0 0.0
    %222 = vmatpush1.msra.mxu0 0.0
    %223 = vmatprep.subr.mxu0 0.0
    %224 = vmatpush1.msra.mxu0 0.0
    %225 = vmatprep.subr.mxu0 0.0
    %226 = vmatpush1.msra.mxu0 0.0
    %227 = vmatprep.subr.mxu0 0.0
    %228 = vmatpush1.msra.mxu0 0.0
    %229 = vmatprep.subr.mxu0 0.0
    %230 = vmatpush1.msra.mxu0 0.0
    %231 = vmatprep.subr.mxu0 0.0
    %232 = vmatpush1.msra.mxu0 0.0
    %233 = vmatprep.subr.mxu0 0.0
    %234 = vmatpush1.msra.mxu0 0.0
    %235 = vmatprep.subr.mxu0 0.0
    %236 = vmatpush1.msra.mxu0 0.0
    %237 = vmatprep.subr.mxu0 0.0
    %238 = vmatpush1.msra.mxu0 0.0
    %239 = vmatprep.subr.mxu0 0.0
    %240 = vmatpush1.msra.mxu0 0.0
    %241 = vmatprep.subr.mxu0 0.0
    %242 = vmatpush1.msra.mxu0 0.0
    %243 = vmatprep.subr.mxu0 0.0
    %244 = vmatpush1.msra.mxu0 0.0
    %245 = vmatprep.subr.mxu0 0.0
    %246 = vmatpush1.msra.mxu0 0.0
    %247 = vmatprep.subr.mxu0 0.0
    %248 = vmatpush1.msra.mxu0 0.0
    %249 = vmatprep.subr.mxu0 0.0
    %250 = vmatpush1.msra.mxu0 0.0
    %251 = vmatprep.mubr.f32.mxu0 0.0
    %252 = vmatmul.mubr.f32.gmra.mrb[0].mxu0 %v163
    %v253 = vpop.f32.mrb[0].mxu0
    %v254 = vadd.f32 %v185, %v253
    %v255 = vpop.f32.mrb[0].mxu0
    %256 = vdwg.mxu0
    %v257 = vmax.f32 %v254, 0.0
    %v258 = vld [vmem:[#allocation7] sm:$0xff]
    %v259 = vld [vmem:[#allocation7 + $0x8] sm:$0xff]
    %v260 = vld [vmem:[#allocation7 + $0x10] sm:$0xff]
    %v261 = vld [vmem:[#allocation7 + $0x18] sm:$0xff]
    %v262 = vld [vmem:[#allocation7 + $0x20] sm:$0xff]
    %v263 = vld [vmem:[#allocation7 + $0x28] sm:$0xff]
    %v264 = vld [vmem:[#allocation7 + $0x30] sm:$0xff]
    %v265 = vld [vmem:[#allocation7 + $0x38] sm:$0xff]
    %v266 = vld [vmem:[#allocation7 + $0x40] sm:$0xff]
    %v267 = vld [vmem:[#allocation7 + $0x48] sm:$0xff]
    %v268 = vld [vmem:[#allocation7 + $0x50] sm:$0xff]
    %v269 = vld [vmem:[#allocation7 + $0x58] sm:$0xff]
    %v270 = vld [vmem:[#allocation7 + $0x60] sm:$0xff]
    %v271 = vld [vmem:[#allocation7 + $0x68] sm:$0xff]
    %v272 = vld [vmem:[#allocation7 + $0x70] sm:$0xff]
    %v273 = vld [vmem:[#allocation7 + $0x78] sm:$0xff]
    %v274 = vld [vmem:[%s6] sm:$0x1]
    %v276 = vlaneseq
    %v277 = vshrl.u32 %v276, 7
    %v278 = vsub.s32 0, %v277
    %v279 = vrot.slane %v274, %v278
    %281 = vmatprep.subr.mxu0 0.0
    %282 = vmatpush1.msra.mxu0 %v258
    %283 = vmatprep.subr.mxu0 0.0
    %284 = vmatpush1.msra.mxu0 %v259
    %285 = vmatprep.subr.mxu0 0.0
    %286 = vmatpush1.msra.mxu0 %v260
    %287 = vmatprep.subr.mxu0 0.0
    %288 = vmatpush1.msra.mxu0 %v261
    %289 = vmatprep.subr.mxu0 0.0
    %290 = vmatpush1.msra.mxu0 %v262
    %291 = vmatprep.subr.mxu0 0.0
    %292 = vmatpush1.msra.mxu0 %v263
    %293 = vmatprep.subr.mxu0 0.0
    %294 = vmatpush1.msra.mxu0 %v264
    %295 = vmatprep.subr.mxu0 0.0
    %296 = vmatpush1.msra.mxu0 %v265
    %297 = vmatprep.subr.mxu0 0.0
    %298 = vmatpush1.msra.mxu0 %v266
    %299 = vmatprep.subr.mxu0 0.0
    %300 = vmatpush1.msra.mxu0 %v267
    %301 = vmatprep.subr.mxu0 0.0
    %302 = vmatpush1.msra.mxu0 %v268
    %303 = vmatprep.subr.mxu0 0.0
    %304 = vmatpush1.msra.mxu0 %v269
    %305 = vmatprep.subr.mxu0 0.0
    %306 = vmatpush1.msra.mxu0 %v270
    %307 = vmatprep.subr.mxu0 0.0
    %308 = vmatpush1.msra.mxu0 %v271
    %309 = vmatprep.subr.mxu0 0.0
    %310 = vmatpush1.msra.mxu0 %v272
    %311 = vmatprep.subr.mxu0 0.0
    %312 = vmatpush1.msra.mxu0 %v273
    %313 = vmatprep.subr.mxu0 0.0
    %314 = vmatpush1.msra.mxu0 0.0
    %315 = vmatprep.subr.mxu0 0.0
    %316 = vmatpush1.msra.mxu0 0.0
    %317 = vmatprep.subr.mxu0 0.0
    %318 = vmatpush1.msra.mxu0 0.0
    %319 = vmatprep.subr.mxu0 0.0
    %320 = vmatpush1.msra.mxu0 0.0
    %321 = vmatprep.subr.mxu0 0.0
    %322 = vmatpush1.msra.mxu0 0.0
    %323 = vmatprep.subr.mxu0 0.0
    %324 = vmatpush1.msra.mxu0 0.0
    %325 = vmatprep.subr.mxu0 0.0
    %326 = vmatpush1.msra.mxu0 0.0
    %327 = vmatprep.subr.mxu0 0.0
    %328 = vmatpush1.msra.mxu0 0.0
    %329 = vmatprep.subr.mxu0 0.0
    %330 = vmatpush1.msra.mxu0 0.0
    %331 = vmatprep.subr.mxu0 0.0
    %332 = vmatpush1.msra.mxu0 0.0
    %333 = vmatprep.subr.mxu0 0.0
    %334 = vmatpush1.msra.mxu0 0.0
    %335 = vmatprep.subr.mxu0 0.0
    %336 = vmatpush1.msra.mxu0 0.0
    %337 = vmatprep.subr.mxu0 0.0
    %338 = vmatpush1.msra.mxu0 0.0
    %339 = vmatprep.subr.mxu0 0.0
    %340 = vmatpush1.msra.mxu0 0.0
    %341 = vmatprep.subr.mxu0 0.0
    %342 = vmatpush1.msra.mxu0 0.0
    %343 = vmatprep.subr.mxu0 0.0
    %344 = vmatpush1.msra.mxu0 0.0
    %345 = vmatprep.mubr.f32.mxu0 0.0
    %346 = vmatmul.mubr.f32.gmra.mrb[0].mxu0 %v257
    %v347 = vpop.f32.mrb[0].mxu0
    %v348 = vadd.f32 %v279, %v347
    %v349 = vpop.f32.mrb[0].mxu0
    %350 = vdwg.mxu0
    %v351 = vlaneseq
    %v352 = vand.u32 %v351, 127
    %vm353 = vcmp.lt.s32.totalorder %v352, 24
    %v354 = vmul.f32 %v348, 1.442695
    %v355 = vpow.pop %v354
    %v356 = vsel %vm353, %v348, %v355
    %357 = vst [vmem:[%s7] sm:$0xff] %v356
    // Predicated region
    $region46: #{emitter_forward.1} parent=1 // pred_check
      _
    $region47: #{emitter_forward.1} parent=1 // pred_check_branch
      %359 = sbr.rel (0) target = $region49
    $region48: #{emitter_forward.1} parent=1 // pred_region
      _
    $region49: #{emitter_forward.1} parent=1 // pred_fallthru
      _
    // Predicated region
    $region50: #{emitter_forward.1} parent=1 // pred_check
      _
    $region51: #{emitter_forward.1} parent=1 // pred_check_branch
      %361 = sbr.rel (0) target = $region53
    $region52: #{emitter_forward.1} parent=1 // pred_region
      _
    $region53: #{emitter_forward.1} parent=1 // pred_fallthru
      _
    %362 = vsyncpa [#allocation3], 1
    %363 = vsyncpa [#allocation5], 1
    %364 = vsyncpa [#allocation8], 1

</llo_original>
